<compile_context>
chip_gen: v5e
topology: v5e:2x2
jax: 0.10.0
libtpu: 0.0.40
codegen_flags: <defaults>
</compile_context>

<pallas_src>
import functools
import math

import jax
import jax.numpy as jnp
import numpy as np
from jax.experimental import pallas as pl
from jax.experimental.pallas import tpu as pltpu


# ----------------------------- configuration --------------------------------
SR = 1000.0          # sample rate
FMIN = 20.0          # lowest CQT frequency
N_BINS = 16          # frequency bins (F)
BINS_PER_OCTAVE = 12
KERNEL_SIZE = 32     # CQT conv kernel length (K)
HOP = 8              # conv stride (hop_length)
POOL = (1, 2)        # max_pool2d kernel (bins, time)
SCALING = 1.0
OUTPUT_POWER = 1.0

OFFSET = 1e-9                          # offset_zero=True
LOG_OFFSET = -math.log(OFFSET)
NORM = SCALING / LOG_OFFSET

STEP = HOP * POOL[1]                           # 16: samples between consecutive pooled frames
SPAN = KERNEL_SIZE + HOP * (POOL[1] - 1)       # 40: samples touched by one pooled frame
NCHUNK = -(-SPAN // STEP)                      # 3 : 16-wide audio chunks per pooled frame
RHS_K = NCHUNK * STEP                          # 48: contraction dim of the fused matmul
HALO_W = 128                                   # lane-aligned halo width (needs >= NCHUNK-1)


def _round_up(x, m):
    return ((x + m - 1) // m) * m


def make_cqt_kernels():
    """Deterministic windowed cos/sin kernel banks, shape (K, F)."""
    n = np.arange(KERNEL_SIZE, dtype=np.float64)
    window = np.hanning(KERNEL_SIZE)
    freqs = FMIN * 2.0 ** (np.arange(N_BINS) / BINS_PER_OCTAVE)   # (F,)
    phase = 2.0 * np.pi * np.outer(n, freqs) / SR                 # (K, F)
    wcos = (window[:, None] * np.cos(phase)) / KERNEL_SIZE
    wsin = (window[:, None] * np.sin(phase)) / KERNEL_SIZE
    return jnp.asarray(wcos, jnp.float32), jnp.asarray(wsin, jnp.float32)


def _fold_weights(wcos, wsin):
    """(K,F) cos/sin banks -> fused, transposed (4F, RHS_K) weight.

    Pooled frame u reads samples audio[16u : 16u+48).  Rows of the fused weight:
      [0:F)   even-frame cos  (samples  0..31 of the 48-window)
      [F:2F)  even-frame sin
      [2F:3F) odd-frame  cos  (samples  8..39, i.e. the +HOP shift folded in)
      [3F:4F) odd-frame  sin
    """
    K, F = wcos.shape
    cols = []
    for shift in range(POOL[1]):                       # the 2 pooled-together conv frames
        pre = shift * HOP
        post = RHS_K - K - pre
        zpre = jnp.zeros((pre, F), wcos.dtype)
        zpost = jnp.zeros((post, F), wcos.dtype)
        cols.append(jnp.concatenate([zpre, wcos, zpost], axis=0))   # (RHS_K, F)
        cols.append(jnp.concatenate([zpre, wsin, zpost], axis=0))   # (RHS_K, F)
    w = jnp.concatenate(cols, axis=1)                  # (RHS_K, 4F)
    return w.T                                         # (4F, RHS_K)


# ------------------------------- Pallas kernel -------------------------------
def _preproc_kernel(x_ref, halo_ref, w_ref, o_ref, *, tile_u, n_bins,
                    offset, log_offset, norm, output_power):
    # x_ref:    (1, STEP, tile_u)   audio rows, time-on-lanes
    # halo_ref: (1, STEP, HALO_W)   next 128 rows of the same array (2 used)
    # w_ref:    (4F, RHS_K)         fused even/odd cos/sin weight, transposed
    # o_ref:    (1, F, tile_u)      NCHW-ready block (bins x pooled time)
    f = n_bins

    # Aligned lane-append of the 128-wide halo (a couple of vregs), then the
    # NCHUNK lane-shifted views are sublane-concatenated into the K=48 RHS.
    full = jnp.concatenate([x_ref[0], halo_ref[0]], axis=-1)        # (STEP, tile_u+HALO_W)
    rhs = jnp.concatenate([full[:, r:r + tile_u] for r in range(NCHUNK)],
                          axis=0)                                    # (RHS_K, tile_u)

    # Single fused MXU matmul; time stays on the lane axis end-to-end.
    acc = jnp.dot(w_ref[...], rhs, preferred_element_type=jnp.float32,
                  precision=jax.lax.Precision.HIGHEST)               # (4F, tile_u)

    amp_even = acc[0:f] * acc[0:f] + acc[f:2 * f] * acc[f:2 * f]          # |CQT(2u)|^2
    amp_odd = (acc[2 * f:3 * f] * acc[2 * f:3 * f]
               + acc[3 * f:4 * f] * acc[3 * f:4 * f])                     # |CQT(2u+1)|^2
    amp = jnp.maximum(amp_even, amp_odd)       # (1,2) time max-pool (log is monotonic)
    y = (jnp.log(amp + offset) + log_offset) * norm
    if output_power != 1.0:
        y = y ** output_power
    o_ref[0] = y.astype(o_ref.dtype)


# ------------------------------- wrapper -------------------------------------
def preprocessing_forward(x, wcos, wsin, *, tile_u=4096, compute_dtype=jnp.float32):
    """x: (B, L) float32 audio  ->  (B, 1, N_BINS, T_pooled) float32 (NCHW)."""
    B, L = x.shape
    K, F = wcos.shape
    T = (L - K) // HOP + 1                 # conv frames
    T_pooled = T // POOL[1]                # frames after the (1, 2) max-pool
    assert T_pooled >= 1, "audio too short for one pooled frame"

    # Pooled-frame tile per grid step: multiple of 128 (lane-dense stores and
    # an aligned halo index).  ~4 MiB of VMEM per step at 4096 incl. double
    # buffers -> inside scoped-VMEM defaults on v5e (16 MiB) / v6e / v7x (32 MiB).
    tile_u = _round_up(max(128, min(int(tile_u), _round_up(T_pooled, 128))), 128)
    if B == 1 and T_pooled > 128:
        # v7x: keep >= 2 grid steps so both TensorCores get work at B == 1.
        tile_u = min(tile_u, _round_up(-(-T_pooled // 2), 128))
    n_tiles = -(-T_pooled // tile_u)
    halo_stride = tile_u // HALO_W

    # Zero-pad + reshape + transpose the (small) raw audio to time-on-lanes:
    # x_t[b, s, r] = audio[b, r*STEP + s].  No im2col, no frame duplication.
    n_rows = max(n_tiles * tile_u + HALO_W, -(-L // STEP))
    x_pad = jnp.pad(x, ((0, 0), (0, n_rows * STEP - L)))
    x_t = jnp.swapaxes(x_pad.reshape(B, n_rows, STEP), 1, 2).astype(compute_dtype)

    wbig = _fold_weights(wcos, wsin).astype(compute_dtype)          # (4F, RHS_K)

    kernel = functools.partial(
        _preproc_kernel, tile_u=tile_u, n_bins=F, offset=OFFSET,
        log_offset=LOG_OFFSET, norm=NORM, output_power=OUTPUT_POWER)

    out = pl.pallas_call(
        kernel,
        # Exact T_pooled on the time axis: the last (ragged) block is clipped
        # on writeback, so there is no post-kernel slice pass over the output.
        out_shape=jax.ShapeDtypeStruct((B, F, T_pooled), jnp.float32),
        grid_spec=pltpu.PrefetchScalarGridSpec(
            num_scalar_prefetch=0,
            grid=(B, n_tiles),
            in_specs=[
                pl.BlockSpec((1, STEP, tile_u), lambda b, j: (b, 0, j)),
                # 128-lane halo window on the SAME array (rows shared with the
                # next tile); tile_u is a multiple of HALO_W, so block index
                # (j+1)*halo_stride starts exactly at the end of tile j.
                pl.BlockSpec((1, STEP, HALO_W),
                             lambda b, j: (b, 0, (j + 1) * halo_stride)),
                pl.BlockSpec((4 * F, RHS_K), lambda b, j: (0, 0)),
            ],
            out_specs=pl.BlockSpec((1, F, tile_u), lambda b, j: (b, 0, j)),
        ),
        compiler_params=pltpu.CompilerParams(
            dimension_semantics=("parallel", "parallel")),
    )(x_t, x_t, wbig)

    # Output is already (B, F, T_pooled) NCHW layout; adding the channel axis
    # is a free reshape (no extra pass over the data).
    return out[:, None, :, :]


# ------------------------------ reference (numpy, float64) -------------------
def preprocessing_reference(x, wcos, wsin):
    x = np.asarray(x, np.float64)
    wcos = np.asarray(wcos, np.float64)
    wsin = np.asarray(wsin, np.float64)
    B, L = x.shape
    K, F = wcos.shape
    T = (L - K) // HOP + 1
    Tp = T // POOL[1]
    Tu = Tp * POOL[1]
    idx = np.arange(Tu)[:, None] * HOP + np.arange(K)[None, :]
    frames = x[:, idx]                               # (B, Tu, K)
    real = frames @ wcos
    imag = frames @ wsin
    amp = real ** 2 + imag ** 2
    y = np.log(amp + OFFSET) + LOG_OFFSET
    y = y.reshape(B, Tp, POOL[1], F).max(axis=2)
    y = y * NORM
    y = y ** OUTPUT_POWER
    return np.transpose(y, (0, 2, 1))[:, None, :, :]


if __name__ == "__main__":
    key = jax.random.PRNGKey(0)
    k1, k2 = jax.random.split(key)
    wcos, wsin = make_cqt_kernels()
    B = 2

    # Case 1: single tile, output block wider than T_pooled (clipped store).
    L1 = (2 * 96 - 1) * HOP + KERNEL_SIZE                   # 1560 samples -> T = 192
    x1 = jax.random.normal(k1, (B, L1), dtype=jnp.float32)
    out1 = jax.block_until_ready(preprocessing_forward(x1, wcos, wsin, tile_u=128))
    ref1 = preprocessing_reference(x1, wcos, wsin)
    assert out1.shape == (B, 1, N_BINS, 96), out1.shape
    np.testing.assert_allclose(np.asarray(out1), ref1, rtol=1e-3, atol=1e-3)

    # Case 2: multi-tile grid (n_tiles = 2) + ragged tail (200 % 128 != 0).
    L2 = (401 - 1) * HOP + KERNEL_SIZE + 5                  # 3237 samples -> T = 401
    x2 = jax.random.normal(k2, (B, L2), dtype=jnp.float32)
    out2 = jax.block_until_ready(preprocessing_forward(x2, wcos, wsin, tile_u=128))
    ref2 = preprocessing_reference(x2, wcos, wsin)
    assert out2.shape == (B, 1, N_BINS, 200), out2.shape
    np.testing.assert_allclose(np.asarray(out2), ref2, rtol=1e-3, atol=1e-3)

    # Case 3: default tile size (clamped to one 256-frame tile for this input).
    out3 = jax.block_until_ready(preprocessing_forward(x2, wcos, wsin))
    np.testing.assert_allclose(np.asarray(out3), ref2, rtol=1e-3, atol=1e-3)

    # Case 4: B == 1 path (tile capped so the parallel grid has >= 2 steps).
    out4 = jax.block_until_ready(preprocessing_forward(x2[:1], wcos, wsin))
    np.testing.assert_allclose(np.asarray(out4), ref2[:1], rtol=1e-3, atol=1e-3)

    print("KERNEL_OK")
</pallas_src>

<mosaic_0001>
module attributes {stable_mosaic.version = 11 : i64} {
  func.func @_preproc_kernel(%arg0: i32, %arg1: i32, %arg2: memref<1x16x128xf32, #tpu.memory_space<vmem>>, %arg3: memref<1x16x128xf32, #tpu.memory_space<vmem>>, %arg4: memref<64x48xf32, #tpu.memory_space<vmem>>, %arg5: memref<1x16x128xf32, #tpu.memory_space<vmem>>) attributes {dimension_semantics = [#tpu.dimension_semantics<parallel>, #tpu.dimension_semantics<parallel>], iteration_bounds = array<i64: 2, 1>, scalar_prefetch = 0 : i64, scratch_operands = 0 : i64, tpu.core_type = #tpu.core_type<tc>, window_params = [{transform_indices = @transform_0, window_bounds = array<i64: 1, 16, 128>}, {transform_indices = @transform_1, window_bounds = array<i64: 1, 16, 128>}, {pipeline_mode = #tpu.pipeline_mode<synchronous>, transform_indices = @transform_2, window_bounds = array<i64: 64, 48>}, {transform_indices = @transform_3, window_bounds = array<i64: 1, 16, 128>}]} {
    %c0 = arith.constant 0 : index
    %c0_0 = arith.constant 0 : index
    %c0_1 = arith.constant 0 : index
    %0 = vector.load %arg2[%c0, %c0_0, %c0_1] : memref<1x16x128xf32, #tpu.memory_space<vmem>>, vector<1x16x128xf32>
    %1 = vector.shape_cast %0 : vector<1x16x128xf32> to vector<16x128xf32>
    %c0_2 = arith.constant 0 : index
    %c0_3 = arith.constant 0 : index
    %c0_4 = arith.constant 0 : index
    %2 = vector.load %arg3[%c0_2, %c0_3, %c0_4] : memref<1x16x128xf32, #tpu.memory_space<vmem>>, vector<1x16x128xf32>
    %3 = vector.shape_cast %2 : vector<1x16x128xf32> to vector<16x128xf32>
    %4 = tpu.concatenate %1, %3 in 1 : vector<16x128xf32>, vector<16x128xf32> -> vector<16x256xf32>
    %5 = vector.extract_strided_slice %4 {offsets = [0, 0], sizes = [16, 128], strides = [1, 1]} : vector<16x256xf32> to vector<16x128xf32>
    %6 = vector.extract_strided_slice %4 {offsets = [0, 1], sizes = [16, 128], strides = [1, 1]} : vector<16x256xf32> to vector<16x128xf32>
    %7 = vector.extract_strided_slice %4 {offsets = [0, 2], sizes = [16, 128], strides = [1, 1]} : vector<16x256xf32> to vector<16x128xf32>
    %8 = tpu.concatenate %5, %6, %7 in 0 : vector<16x128xf32>, vector<16x128xf32>, vector<16x128xf32> -> vector<48x128xf32>
    %c0_5 = arith.constant 0 : index
    %c0_6 = arith.constant 0 : index
    %9 = vector.load %arg4[%c0_5, %c0_6] : memref<64x48xf32, #tpu.memory_space<vmem>>, vector<64x48xf32>
    %cst = arith.constant dense<0.000000e+00> : vector<64x128xf32>
    %10 = tpu.matmul %9, %8, %cst {dimension_numbers = #tpu.dot_dimension_numbers<[1], [0], [0], [1], [0, 0, 1, 1], [], []>, precision = #tpu.contract_precision<fp32>} : vector<64x48xf32>, vector<48x128xf32>, vector<64x128xf32> -> vector<64x128xf32>
    %11 = vector.extract_strided_slice %10 {offsets = [0, 0], sizes = [16, 128], strides = [1, 1]} : vector<64x128xf32> to vector<16x128xf32>
    %12 = vector.extract_strided_slice %10 {offsets = [0, 0], sizes = [16, 128], strides = [1, 1]} : vector<64x128xf32> to vector<16x128xf32>
    %13 = arith.mulf %11, %12 : vector<16x128xf32>
    %14 = vector.extract_strided_slice %10 {offsets = [16, 0], sizes = [16, 128], strides = [1, 1]} : vector<64x128xf32> to vector<16x128xf32>
    %15 = vector.extract_strided_slice %10 {offsets = [16, 0], sizes = [16, 128], strides = [1, 1]} : vector<64x128xf32> to vector<16x128xf32>
    %16 = arith.mulf %14, %15 : vector<16x128xf32>
    %17 = arith.addf %13, %16 : vector<16x128xf32>
    %18 = vector.extract_strided_slice %10 {offsets = [32, 0], sizes = [16, 128], strides = [1, 1]} : vector<64x128xf32> to vector<16x128xf32>
    %19 = vector.extract_strided_slice %10 {offsets = [32, 0], sizes = [16, 128], strides = [1, 1]} : vector<64x128xf32> to vector<16x128xf32>
    %20 = arith.mulf %18, %19 : vector<16x128xf32>
    %21 = vector.extract_strided_slice %10 {offsets = [48, 0], sizes = [16, 128], strides = [1, 1]} : vector<64x128xf32> to vector<16x128xf32>
    %22 = vector.extract_strided_slice %10 {offsets = [48, 0], sizes = [16, 128], strides = [1, 1]} : vector<64x128xf32> to vector<16x128xf32>
    %23 = arith.mulf %21, %22 : vector<16x128xf32>
    %24 = arith.addf %20, %23 : vector<16x128xf32>
    %25 = arith.maximumf %17, %24 : vector<16x128xf32>
    %cst_7 = arith.constant 9.99999971E-10 : f32
    %26 = vector.broadcast %cst_7 : f32 to vector<16x128xf32>
    %27 = arith.addf %25, %26 : vector<16x128xf32>
    %28 = math.log %27 : vector<16x128xf32>
    %cst_8 = arith.constant 20.7232666 : f32
    %29 = vector.broadcast %cst_8 : f32 to vector<16x128xf32>
    %30 = arith.addf %28, %29 : vector<16x128xf32>
    %cst_9 = arith.constant 0.0482549407 : f32
    %31 = vector.broadcast %cst_9 : f32 to vector<16x128xf32>
    %32 = arith.mulf %30, %31 : vector<16x128xf32>
    %c0_10 = arith.constant 0 : index
    %c0_11 = arith.constant 0 : index
    %c0_12 = arith.constant 0 : index
    %33 = vector.load %arg5[%c0_10, %c0_11, %c0_12] : memref<1x16x128xf32, #tpu.memory_space<vmem>>, vector<1x16x128xf32>
    %34 = vector.shape_cast %33 : vector<1x16x128xf32> to vector<16x128xf32>
    %35 = vector.shape_cast %32 : vector<16x128xf32> to vector<1x16x128xf32>
    tpu.vector_store %arg5[%c0_10, %c0_11, %c0_12], %35 {strides = array<i32>} : memref<1x16x128xf32, #tpu.memory_space<vmem>>, vector<1x16x128xf32>,
    return
  }
  func.func @transform_0(%arg0: i32, %arg1: i32) -> (i32, i32, i32) {
    %c0_i32 = arith.constant 0 : i32
    %c0_i32_0 = arith.constant 0 : i32
    return %arg0, %c0_i32, %arg1 : i32, i32, i32
  }
  func.func @transform_1(%arg0: i32, %arg1: i32) -> (i32, i32, i32) {
    %c1_i32 = arith.constant 1 : i32
    %0 = arith.addi %arg1, %c1_i32 : i32
    %c1_i32_0 = arith.constant 1 : i32
    %1 = arith.muli %0, %c1_i32_0 : i32
    %c0_i32 = arith.constant 0 : i32
    %c0_i32_1 = arith.constant 0 : i32
    return %arg0, %c0_i32, %1 : i32, i32, i32
  }
  func.func @transform_2(%arg0: i32, %arg1: i32) -> (i32, i32) {
    %c0_i32 = arith.constant 0 : i32
    %c0_i32_0 = arith.constant 0 : i32
    %c0_i32_1 = arith.constant 0 : i32
    return %c0_i32, %c0_i32_0 : i32, i32
  }
  func.func @transform_3(%arg0: i32, %arg1: i32) -> (i32, i32, i32) {
    %c0_i32 = arith.constant 0 : i32
    %c0_i32_0 = arith.constant 0 : i32
    return %arg0, %c0_i32, %arg1 : i32, i32, i32
  }
}

</mosaic_0001>

<llo_original>
// kernel: tpu_custom_call.1
$region0: #{tpu_custom_call.1}
  #allocation0 [shape = 'u32[]', space=smem, size = 0x4, offset = 0x4, fixed_abs, tag = 'smem constant byte address 0x4 - core index']
  #allocation1 [shape = 'u32[72,128]{1,0:T(1,128)}', space=vmem, size = 0x9000, scoped, tag = 'internal scratch']
  %s0 = inlined_call_operand.vmem [shape: f32[2,16,256], index: 0, kind: input, shape index: {}]
  %s1 = inlined_call_operand.hbm [shape: f32[2,16,256], index: 1, kind: input, shape index: {}]
  %s2 = inlined_call_operand.vmem [shape: f32[64,48], index: 2, kind: input, shape index: {}]
  %s3 = inlined_call_operand.hbm [shape: f32[2,16,96], index: 3, kind: output, shape index: {}]
  %s4 = sld [smem:[#allocation0]]
  $region87: #{tpu_custom_call.1} parent=0
    _
  %s6 = ssub.s32 1, %s4
  %s7 = scalar_select 0, %s6, %s4
  $region1: #{tpu_custom_call.1} parent=0
    #allocation2 [shape = 'u8[16384]{0}', space=vmem, size = 0x4000, scoped, tag = 'input window, operand 0']
    #allocation3 [shape = 'u8[16384]{0}', space=vmem, size = 0x4000, scoped, tag = 'input window, operand 1']
    #allocation4 [shape = 's32[2]{0}', space=sflag, size = 0x8, scoped, tag = 'scoped memory for tpu_custom_call.1']
    #allocation5 [shape = 's32[2]{0}', space=sflag, size = 0x8, scoped, tag = 'scoped memory for tpu_custom_call.1']
    #allocation6 [shape = 'u8[16384]{0}', space=vmem, size = 0x4000, scoped, tag = 'output window, operand 0']
    %8 = vsyncpa [#allocation4], 0
    %s9 = scalar_lea.sflag [#allocation4], 1
    %10 = vsyncpa %s9, 0
    %11 = vsyncpa [#allocation5], 0
    %s12 = scalar_lea.sflag [#allocation5], 1
    %13 = vsyncpa %s12, 0
    loop: start=0, step=1, limit=4
    $region2: #{tpu_custom_call.1} parent=1 // loop_pre_header
      _
    $region3: #{tpu_custom_call.1} parent=1 // loop_header
      %s15 = sphi 0, %s19
      %p16 = scmp.ge.s32.totalorder %s15, 4
      %s22 = sphi 0, %s34
      %s23 = sphi 0, %s30
      %s24 = sphi 0, %s22
      %s25 = sphi 0, %s23
      %s26 = sphi 0, %s24
      %s27 = sphi 0, %s25
      %s39 = sphi 0, %s41
      %s42 = sphi 0, %s39
      %s43 = sphi 0, %s42
      %s59 = sphi 0, %s43
      %s69 = sphi 0, %s71
      %s72 = sphi 0, %s69
      %s73 = sphi 0, %s72
      %s89 = sphi 0, %s73
      %s93 = sphi 0, %s93
      %s95 = sphi 0, %s93
      %s96 = sphi 0, %s95
      %s110 = sphi 0, %s96
      %s118 = sphi 0, %s120
      %s121 = sphi 0, %s118
      %s122 = sphi 0, %s121
      %s138 = sphi 0, %s122
    $region4: #{tpu_custom_call.1} parent=1 // loop_header_branch
      %18 = sbr.rel (%p16) target = $region8
    $region5: #{tpu_custom_call.1} parent=1 // loop_body
      %s20 = ssub.s32 %s15, 1
      %s21 = ssub.s32 %s15, 2
      %s28 = sadd.s32 1, %s23
      %p29 = scmp.ge.s32.totalorder %s28, 1
      %s30 = scalar_select %p29, 0, %s28
      %s31 = sadd.s32 1, %s22
      %s32 = scalar_select %p29, %s31, %s22
      %p33 = scmp.ge.s32.totalorder %s32, 2
      %s34 = scalar_select %p33, 0, %s32
      %s35 = ssub.s32 %s22, %s34
      %s36 = ssub.s32 %s23, %s30
      %s37 = sor.u32 %s35, %s36
      %p38 = scmp.eq.s32.totalorder %s37, 0
      %s40 = sadd.s32 %s39, 1
      %s41 = scalar_select %p38, %s39, %s40
      %p44 = pneg %p38
      %p45 = scmp.eq.s32.totalorder %s15, 1
      %p46 = por %p44, %p45
      %p47 = scmp.ne.s32.totalorder %s39, %s42
      %p48 = scmp.eq.s32.totalorder %s15, 0
      %p49 = por %p47, %p48
      %p50 = scmp.ne.s32.totalorder %s39, %s42
      %p51 = scmp.eq.s32.totalorder %s20, 1
      %p52 = por %p50, %p51
      %p53 = scmp.ne.s32.totalorder %s42, %s43
      %p54 = scmp.eq.s32.totalorder %s20, 0
      %p55 = por %p53, %p54
      %p56 = scmp.ne.s32.totalorder %s42, %s43
      %p57 = scmp.eq.s32.totalorder %s21, 1
      %p58 = por %p56, %p57
      %p60 = scmp.ne.s32.totalorder %s43, %s59
      %p61 = scmp.eq.s32.totalorder %s21, 0
      %p62 = por %p60, %p61
      %s63 = sadd.s32 %s23, 1
      %s64 = sadd.s32 %s30, 1
      %s65 = ssub.s32 %s22, %s34
      %s66 = ssub.s32 %s63, %s64
      %s67 = sor.u32 %s65, %s66
      %p68 = scmp.eq.s32.totalorder %s67, 0
      %s70 = sadd.s32 %s69, 1
      %s71 = scalar_select %p68, %s69, %s70
      %p74 = pneg %p68
      %p75 = scmp.eq.s32.totalorder %s15, 1
      %p76 = por %p74, %p75
      %p77 = scmp.ne.s32.totalorder %s69, %s72
      %p78 = scmp.eq.s32.totalorder %s15, 0
      %p79 = por %p77, %p78
      %p80 = scmp.ne.s32.totalorder %s69, %s72
      %p81 = scmp.eq.s32.totalorder %s20, 1
      %p82 = por %p80, %p81
      %p83 = scmp.ne.s32.totalorder %s72, %s73
      %p84 = scmp.eq.s32.totalorder %s20, 0
      %p85 = por %p83, %p84
      %p86 = scmp.ne.s32.totalorder %s72, %s73
      %p87 = scmp.eq.s32.totalorder %s21, 1
      %p88 = por %p86, %p87
      %p90 = scmp.ne.s32.totalorder %s73, %s89
      %p91 = scmp.eq.s32.totalorder %s21, 0
      %p92 = por %p90, %p91
      %s94 = sadd.s32 %s93, 1
      %p97 = scmp.eq.s32.totalorder %s15, 1
      %p98 = scmp.ne.s32.totalorder %s93, %s95
      %p99 = scmp.eq.s32.totalorder %s15, 0
      %p100 = por %p98, %p99
      %p101 = scmp.ne.s32.totalorder %s93, %s95
      %p102 = scmp.eq.s32.totalorder %s20, 1
      %p103 = por %p101, %p102
      %p104 = scmp.ne.s32.totalorder %s95, %s96
      %p105 = scmp.eq.s32.totalorder %s20, 0
      %p106 = por %p104, %p105
      %p107 = scmp.ne.s32.totalorder %s95, %s96
      %p108 = scmp.eq.s32.totalorder %s21, 1
      %p109 = por %p107, %p108
      %p111 = scmp.ne.s32.totalorder %s96, %s110
      %p112 = scmp.eq.s32.totalorder %s21, 0
      %p113 = por %p111, %p112
      %s114 = ssub.s32 %s22, %s34
      %s115 = ssub.s32 %s23, %s30
      %s116 = sor.u32 %s114, %s115
      %p117 = scmp.eq.s32.totalorder %s116, 0
      %s119 = sadd.s32 %s118, 1
      %s120 = scalar_select %p117, %s118, %s119
      %p123 = pneg %p117
      %p124 = scmp.eq.s32.totalorder %s15, 1
      %p125 = por %p123, %p124
      %p126 = scmp.ne.s32.totalorder %s118, %s121
      %p127 = scmp.eq.s32.totalorder %s15, 0
      %p128 = por %p126, %p127
      %p129 = scmp.ne.s32.totalorder %s118, %s121
      %p130 = scmp.eq.s32.totalorder %s20, 1
      %p131 = por %p129, %p130
      %p132 = scmp.ne.s32.totalorder %s121, %s122
      %p133 = scmp.eq.s32.totalorder %s20, 0
      %p134 = por %p132, %p133
      %p135 = scmp.ne.s32.totalorder %s121, %s122
      %p136 = scmp.eq.s32.totalorder %s21, 1
      %p137 = por %p135, %p136
      %p139 = scmp.ne.s32.totalorder %s122, %s138
      %p140 = scmp.eq.s32.totalorder %s21, 0
      %p141 = por %p139, %p140
      %p142 = scmp.le.s32.totalorder 1, %s15
      %p143 = scmp.lt.s32.totalorder %s15, 3
      %p144 = pnand %p142, %p143
      %p145 = pneg %p144
      // Predicated region
      $region9: #{tpu_custom_call.1} parent=5 // pred_check
        _
      $region10: #{tpu_custom_call.1} parent=5 // pred_check_branch
        %147 = sbr.rel (%p144) target = $region12
      $region11: #{tpu_custom_call.1} parent=5 // pred_region
        %s148 = ssub.s32 %s15, 1
        // Predicated region
        $region13: #{tpu_custom_call.1} parent=11 // pred_check
          %p149 = pneg %p106
        $region14: #{tpu_custom_call.1} parent=11 // pred_check_branch
          %151 = sbr.rel (%p149) target = $region16
        $region15: #{tpu_custom_call.1} parent=11 // pred_region
          _
        $region16: #{tpu_custom_call.1} parent=11 // pred_fallthru
          _
      $region12: #{tpu_custom_call.1} parent=5 // pred_fallthru
        _
      %p152 = scmp.lt.s32.totalorder %s15, 2
      // Predicated region
      $region17: #{tpu_custom_call.1} parent=5 // pred_check
        %p153 = pneg %p152
      $region18: #{tpu_custom_call.1} parent=5 // pred_check_branch
        %155 = sbr.rel (%p153) target = $region20
      $region19: #{tpu_custom_call.1} parent=5 // pred_region
        // Predicated region
        $region21: #{tpu_custom_call.1} parent=19 // pred_check
          %p156 = pneg %p49
        $region22: #{tpu_custom_call.1} parent=19 // pred_check_branch
          %158 = sbr.rel (%p156) target = $region24
        $region23: #{tpu_custom_call.1} parent=19 // pred_region
          %s159 = sand.u32 %s39, 1
          %s160 = sand.u32 %s39, 1
          %s161 = smul.addr %s160, 16
          %s162 = scalar_lea.vmem [#allocation2], %s161
          %s163 = smul.addr %s22, 4
          %s164 = sadd.s32 %s23, %s163
          %s165 = smul.addr %s164, 8
          %s166 = scalar_lea.vmem %s0, %s165
          // Predicated region
          $region25: #{tpu_custom_call.1} parent=23 // pred_check
            _
          $region26: #{tpu_custom_call.1} parent=23 // pred_check_branch
            %168 = sbr.rel (0) target = $region28
          $region27: #{tpu_custom_call.1} parent=23 // pred_region
            // Predicated region
            $region29: #{tpu_custom_call.1} parent=27 // pred_check
              _
            $region30: #{tpu_custom_call.1} parent=27 // pred_check_branch
              %170 = sbr.rel (0) target = $region32
            $region31: #{tpu_custom_call.1} parent=27 // pred_region
              // Predicated region
              $region44: #{tpu_custom_call.1} parent=31 // pred_check
                _
              $region45: #{tpu_custom_call.1} parent=31 // pred_check_branch
                %188 = sbr.rel (0) target = $region47
              $region46: #{tpu_custom_call.1} parent=31 // pred_region
                loop: start=0, step=1, limit=1
                $region48: #{tpu_custom_call.1} parent=46 // loop_pre_header
                  _
                $region49: #{tpu_custom_call.1} parent=46 // loop_header
                  %s190 = sphi 0, %s194
                  %p191 = scmp.ge.s32.totalorder %s190, 1
                  %s195 = sphi %s166, %s166
                  %s196 = sphi %s162, %s162
                $region50: #{tpu_custom_call.1} parent=46 // loop_header_branch
                  %193 = sbr.rel (%p191) target = $region54
                $region51: #{tpu_custom_call.1} parent=46 // loop_body
                  %v197 = vld [vmem:[%s195] sm:$0xff]
                  %198 = vst [vmem:[%s196] sm:$0xff] %v197
                  %v199 = vld [vmem:[%s195 + $0x10] sm:$0xff]
                  %200 = vst [vmem:[%s196 + $0x8] sm:$0xff] %v199
                $region52: #{tpu_custom_call.1} parent=46 // loop_footer
                  %s194 = sadd.s32 1, %s190
                $region53: #{tpu_custom_call.1} parent=46 // loop_footer_branch
                  %189 = sbr.rel target = $region49
                $region54: #{tpu_custom_call.1} parent=46 // loop_exit
                  _
              $region47: #{tpu_custom_call.1} parent=31 // pred_fallthru
                _
              // Predicated region
              $region55: #{tpu_custom_call.1} parent=31 // pred_check
                _
              $region56: #{tpu_custom_call.1} parent=31 // pred_check_branch
                %202 = sbr.rel target = $region58
              $region57: #{tpu_custom_call.1} parent=31 // pred_region
                _
              $region58: #{tpu_custom_call.1} parent=31 // pred_fallthru
                _
            $region32: #{tpu_custom_call.1} parent=27 // pred_fallthru
              _
            // Predicated region
            $region33: #{tpu_custom_call.1} parent=27 // pred_check
              _
            $region34: #{tpu_custom_call.1} parent=27 // pred_check_branch
              %172 = sbr.rel target = $region36
            $region35: #{tpu_custom_call.1} parent=27 // pred_region
              %s174 = ssub.s32 256, 1
              loop: start=0, step=1, limit=1
              $region37: #{tpu_custom_call.1} parent=35 // loop_pre_header
                _
              $region38: #{tpu_custom_call.1} parent=35 // loop_header
                %s176 = sphi 0, %s180
                %p177 = scmp.ge.s32.totalorder %s176, 1
                %s181 = sphi %s166, %s166
                %s182 = sphi %s162, %s162
              $region39: #{tpu_custom_call.1} parent=35 // loop_header_branch
                %179 = sbr.rel (%p177) target = $region43
              $region40: #{tpu_custom_call.1} parent=35 // loop_body
                %v183 = vld [vmem:[%s181] sm:%s174]
                %184 = vst [vmem:[%s182] sm:%s174] %v183
                %v185 = vld [vmem:[%s181 + $0x10] sm:%s174]
                %186 = vst [vmem:[%s182 + $0x8] sm:%s174] %v185
              $region41: #{tpu_custom_call.1} parent=35 // loop_footer
                %s180 = sadd.s32 1, %s176
              $region42: #{tpu_custom_call.1} parent=35 // loop_footer_branch
                %175 = sbr.rel target = $region38
              $region43: #{tpu_custom_call.1} parent=35 // loop_exit
                _
            $region36: #{tpu_custom_call.1} parent=27 // pred_fallthru
              _
          $region28: #{tpu_custom_call.1} parent=23 // pred_fallthru
            _
          %203 = vnop
        $region24: #{tpu_custom_call.1} parent=19 // pred_fallthru
          _
        // Predicated region
        $region59: #{tpu_custom_call.1} parent=19 // pred_check
          %p204 = pneg %p79
        $region60: #{tpu_custom_call.1} parent=19 // pred_check_branch
          %206 = sbr.rel (%p204) target = $region62
        $region61: #{tpu_custom_call.1} parent=19 // pred_region
          %s207 = sand.u32 %s69, 1
          %s208 = scalar_lea.sflag [#allocation4], %s207
          %s209 = sand.u32 %s69, 1
          %s210 = smul.addr %s209, 16
          %s211 = scalar_lea.vmem [#allocation3], %s210
          %s212 = sadd.s32 %s23, 1
          %214 = vsyncadd %s208, 0
          %s215 = smul.addr %s22, 4
          %s216 = sadd.s32 %s212, %s215
          %s217 = smul.addr %s216, 8
          %s218 = scalar_lea.hbm %s1, %s217
          %s219 = sshll.u32 %s218, 4
          %s220 = int_to_ptr.hbm [resolvable:$true] %s219
          %s221 = sshll.u32 %s211, 4
          %s222 = int_to_ptr.vmem [resolvable:$true] %s221
          %227 = dma.hbm_to_vmem [thread:$0]  %s220, 256, %s222, %s208, 256, 128, 8
        $region62: #{tpu_custom_call.1} parent=19 // pred_fallthru
          _
      $region20: #{tpu_custom_call.1} parent=5 // pred_fallthru
        _
      %p228 = scmp.le.s32.totalorder 1, %s15
      %p229 = scmp.lt.s32.totalorder %s15, 3
      %p230 = pnand %p228, %p229
      %p231 = pneg %p230
      // Predicated region
      $region63: #{tpu_custom_call.1} parent=5 // pred_check
        _
      $region64: #{tpu_custom_call.1} parent=5 // pred_check_branch
        %233 = sbr.rel (%p230) target = $region66
      $region65: #{tpu_custom_call.1} parent=5 // pred_region
        %s234 = ssub.s32 %s15, 1
        %s235 = sand.u32 %s42, 1
        %s236 = sand.u32 %s42, 1
        %s237 = smul.addr %s236, 16
        %s238 = scalar_lea.vmem [#allocation2], %s237
        // Predicated region
        $region67: #{tpu_custom_call.1} parent=65 // pred_check
          %p239 = pneg %p55
        $region68: #{tpu_custom_call.1} parent=65 // pred_check_branch
          %241 = sbr.rel (%p239) target = $region70
        $region69: #{tpu_custom_call.1} parent=65 // pred_region
          _
        $region70: #{tpu_custom_call.1} parent=65 // pred_fallthru
          _
        %s242 = sand.u32 %s72, 1
        %s243 = scalar_lea.sflag [#allocation4], %s242
        %s244 = sand.u32 %s72, 1
        %s245 = smul.addr %s244, 16
        %s246 = scalar_lea.vmem [#allocation3], %s245
        // Predicated region
        $region71: #{tpu_custom_call.1} parent=65 // pred_check
          %p247 = pneg %p85
        $region72: #{tpu_custom_call.1} parent=65 // pred_check_branch
          %249 = sbr.rel (%p247) target = $region74
        $region73: #{tpu_custom_call.1} parent=65 // pred_region
          %251 = dma.done %s243, 256
        $region74: #{tpu_custom_call.1} parent=65 // pred_fallthru
          _
        %s252 = sand.u32 %s42, 1
        %s253 = sand.u32 %s42, 1
        %s254 = smul.addr %s253, 16
        %s255 = scalar_lea.vmem [#allocation2], %s254
        %p256 = pneg %p55
        %p257 = pneg %p52
        %s258 = sand.u32 %s72, 1
        %s259 = scalar_lea.sflag [#allocation4], %s258
        %s260 = sand.u32 %s72, 1
        %s261 = smul.addr %s260, 16
        %s262 = scalar_lea.vmem [#allocation3], %s261
        %p263 = pneg %p85
        %p264 = pneg %p82
        %p265 = pneg %p106
        %p266 = pneg %p103
        %p267 = pneg %p134
        %p268 = pneg %p131
        %s269 = sand.u32 %s121, 1
        %s270 = scalar_lea.sflag [#allocation5], %s269
        %s271 = sand.u32 %s121, 1
        %s272 = smul.addr %s271, 16
        %s273 = scalar_lea.vmem [#allocation6], %s272
        %s274 = sadd.s32 %s25, 1
        %v275 = vld [vmem:[%s238] sm:$0xff]
        %v276 = vld [vmem:[%s238 + $0x8] sm:$0xff]
        %v277 = vld [vmem:[%s246] sm:$0xff]
        %v278 = vld [vmem:[%s246 + $0x8] sm:$0xff]
        %283 = vrot.lane.b32.xlu0 %v275, 127
        %v284 = vpop.permute.xlu0 %283
        %285 = vrot.lane.b32.xlu0 %v277, 127
        %v286 = vpop.permute.xlu0 %285
        %287 = vrot.lane.b32.xlu0 %v276, 127
        %v288 = vpop.permute.xlu0 %287
        %289 = vrot.lane.b32.xlu0 %v278, 127
        %v290 = vpop.permute.xlu0 %289
        %vm291 = vcmask 1039360
        %v292 = vsel %vm291, %v284, %v286
        %v293 = vsel %vm291, %v288, %v290
        %296 = vrot.lane.b32.xlu0 %v275, 126
        %v297 = vpop.permute.xlu0 %296
        %298 = vrot.lane.b32.xlu0 %v277, 126
        %v299 = vpop.permute.xlu0 %298
        %300 = vrot.lane.b32.xlu0 %v276, 126
        %v301 = vpop.permute.xlu0 %300
        %302 = vrot.lane.b32.xlu0 %v278, 126
        %v303 = vpop.permute.xlu0 %302
        %vm304 = vcmask 1031168
        %v305 = vsel %vm304, %v297, %v299
        %v306 = vsel %vm304, %v301, %v303
        %v309 = vld [vmem:[%s2] sm:$0xff]
        %v310 = vld [vmem:[%s2 + $0x8] sm:$0xff]
        %v311 = vld [vmem:[%s2 + $0x10] sm:$0xff]
        %v312 = vld [vmem:[%s2 + $0x18] sm:$0xff]
        %v313 = vld [vmem:[%s2 + $0x20] sm:$0xff]
        %v314 = vld [vmem:[%s2 + $0x28] sm:$0xff]
        %v315 = vld [vmem:[%s2 + $0x30] sm:$0xff]
        %v316 = vld [vmem:[%s2 + $0x38] sm:$0xff]
        %vm317 = vcmask 392192
        %v319 = vsel %vm317, %v309, 0
        %v322 = vsel %vm317, %v310, 0
        %v325 = vsel %vm317, %v311, 0
        %v328 = vsel %vm317, %v312, 0
        %v331 = vsel %vm317, %v313, 0
        %v334 = vsel %vm317, %v314, 0
        %v337 = vsel %vm317, %v315, 0
        %v340 = vsel %vm317, %v316, 0
        %342 = vmatpush.msra.mxu0 0.0
        %343 = vmatpush.msra.mxu0 0.0
        %344 = vmatpush.msra.mxu0 0.0
        %345 = vmatpush.msra.mxu0 0.0
        %346 = vmatpush.msra.mxu0 0.0
        %347 = vmatpush.msra.mxu0 0.0
        %348 = vmatpush.msra.mxu0 0.0
        %349 = vmatpush.msra.mxu0 0.0
        %350 = vmatpush.msra.mxu0 0.0
        %351 = vmatpush.msra.mxu0 0.0
        %v352 = vand.u32 %v306, 4294901760
        %353 = vmatpush.msra.mxu0 %v352
        %v354 = vand.u32 %v305, 4294901760
        %355 = vmatpush.msra.mxu0 %v354
        %v356 = vand.u32 %v293, 4294901760
        %357 = vmatpush.msra.mxu0 %v356
        %v358 = vand.u32 %v292, 4294901760
        %359 = vmatpush.msra.mxu0 %v358
        %v360 = vand.u32 %v276, 4294901760
        %361 = vmatpush.msra.mxu0 %v360
        %v362 = vand.u32 %v275, 4294901760
        %363 = vmatpush.msra.mxu0 %v362
        %v364 = vand.u32 %v319, 4294901760
        %v365 = vsub.f32 %v319, %v364
        %v366 = vand.u32 %v365, 4294901760
        %v367 = vsub.f32 %v365, %v366
        %v368 = vand.u32 %v367, 4294901760
        %369 = vmatmul.f32.gmra.mxu0 %v368
        %v370 = vpop.f32.mrf.mxu0
        %v371 = vadd.f32 0.0, %v370
        %v372 = vand.u32 %v322, 4294901760
        %v373 = vsub.f32 %v322, %v372
        %v374 = vand.u32 %v373, 4294901760
        %v375 = vsub.f32 %v373, %v374
        %v376 = vand.u32 %v375, 4294901760
        %377 = vmatmul.f32.gmra.mxu0 %v376
        %v378 = vpop.f32.mrf.mxu0
        %v379 = vadd.f32 0.0, %v378
        %v380 = vand.u32 %v325, 4294901760
        %v381 = vsub.f32 %v325, %v380
        %v382 = vand.u32 %v381, 4294901760
        %v383 = vsub.f32 %v381, %v382
        %v384 = vand.u32 %v383, 4294901760
        %385 = vmatmul.f32.gmra.mxu0 %v384
        %v386 = vpop.f32.mrf.mxu0
        %v387 = vadd.f32 0.0, %v386
        %v388 = vand.u32 %v328, 4294901760
        %v389 = vsub.f32 %v328, %v388
        %v390 = vand.u32 %v389, 4294901760
        %v391 = vsub.f32 %v389, %v390
        %v392 = vand.u32 %v391, 4294901760
        %393 = vmatmul.f32.gmra.mxu0 %v392
        %v394 = vpop.f32.mrf.mxu0
        %v395 = vadd.f32 0.0, %v394
        %v396 = vand.u32 %v331, 4294901760
        %v397 = vsub.f32 %v331, %v396
        %v398 = vand.u32 %v397, 4294901760
        %v399 = vsub.f32 %v397, %v398
        %v400 = vand.u32 %v399, 4294901760
        %401 = vmatmul.f32.gmra.mxu0 %v400
        %v402 = vpop.f32.mrf.mxu0
        %v403 = vadd.f32 0.0, %v402
        %v404 = vand.u32 %v334, 4294901760
        %v405 = vsub.f32 %v334, %v404
        %v406 = vand.u32 %v405, 4294901760
        %v407 = vsub.f32 %v405, %v406
        %v408 = vand.u32 %v407, 4294901760
        %409 = vmatmul.f32.gmra.mxu0 %v408
        %v410 = vpop.f32.mrf.mxu0
        %v411 = vadd.f32 0.0, %v410
        %v412 = vand.u32 %v337, 4294901760
        %v413 = vsub.f32 %v337, %v412
        %v414 = vand.u32 %v413, 4294901760
        %v415 = vsub.f32 %v413, %v414
        %v416 = vand.u32 %v415, 4294901760
        %417 = vmatmul.f32.gmra.mxu0 %v416
        %v418 = vpop.f32.mrf.mxu0
        %v419 = vadd.f32 0.0, %v418
        %v420 = vand.u32 %v340, 4294901760
        %v421 = vsub.f32 %v340, %v420
        %v422 = vand.u32 %v421, 4294901760
        %v423 = vsub.f32 %v421, %v422
        %v424 = vand.u32 %v423, 4294901760
        %425 = vmatmul.f32.gmra.mxu0 %v424
        %v426 = vpop.f32.mrf.mxu0
        %v427 = vadd.f32 0.0, %v426
        %428 = vdwg.mxu0
        %429 = vmatpush.msra.mxu0 0.0
        %430 = vmatpush.msra.mxu0 0.0
        %431 = vmatpush.msra.mxu0 0.0
        %432 = vmatpush.msra.mxu0 0.0
        %433 = vmatpush.msra.mxu0 0.0
        %434 = vmatpush.msra.mxu0 0.0
        %435 = vmatpush.msra.mxu0 0.0
        %436 = vmatpush.msra.mxu0 0.0
        %437 = vmatpush.msra.mxu0 0.0
        %438 = vmatpush.msra.mxu0 0.0
        %v439 = vand.u32 %v306, 4294901760
        %v440 = vsub.f32 %v306, %v439
        %v441 = vand.u32 %v440, 4294901760
        %v442 = vsub.f32 %v440, %v441
        %v443 = vand.u32 %v442, 4294901760
        %444 = vmatpush.msra.mxu0 %v443
        %v445 = vand.u32 %v305, 4294901760
        %v446 = vsub.f32 %v305, %v445
        %v447 = vand.u32 %v446, 4294901760
        %v448 = vsub.f32 %v446, %v447
        %v449 = vand.u32 %v448, 4294901760
        %450 = vmatpush.msra.mxu0 %v449
        %v451 = vand.u32 %v293, 4294901760
        %v452 = vsub.f32 %v293, %v451
        %v453 = vand.u32 %v452, 4294901760
        %v454 = vsub.f32 %v452, %v453
        %v455 = vand.u32 %v454, 4294901760
        %456 = vmatpush.msra.mxu0 %v455
        %v457 = vand.u32 %v292, 4294901760
        %v458 = vsub.f32 %v292, %v457
        %v459 = vand.u32 %v458, 4294901760
        %v460 = vsub.f32 %v458, %v459
        %v461 = vand.u32 %v460, 4294901760
        %462 = vmatpush.msra.mxu0 %v461
        %v463 = vand.u32 %v276, 4294901760
        %v464 = vsub.f32 %v276, %v463
        %v465 = vand.u32 %v464, 4294901760
        %v466 = vsub.f32 %v464, %v465
        %v467 = vand.u32 %v466, 4294901760
        %468 = vmatpush.msra.mxu0 %v467
        %v469 = vand.u32 %v275, 4294901760
        %v470 = vsub.f32 %v275, %v469
        %v471 = vand.u32 %v470, 4294901760
        %v472 = vsub.f32 %v470, %v471
        %v473 = vand.u32 %v472, 4294901760
        %474 = vmatpush.msra.mxu0 %v473
        %v475 = vand.u32 %v319, 4294901760
        %476 = vmatmul.f32.gmra.mxu0 %v475
        %v477 = vpop.f32.mrf.mxu0
        %v478 = vadd.f32 %v371, %v477
        %v479 = vand.u32 %v322, 4294901760
        %480 = vmatmul.f32.gmra.mxu0 %v479
        %v481 = vpop.f32.mrf.mxu0
        %v482 = vadd.f32 %v379, %v481
        %v483 = vand.u32 %v325, 4294901760
        %484 = vmatmul.f32.gmra.mxu0 %v483
        %v485 = vpop.f32.mrf.mxu0
        %v486 = vadd.f32 %v387, %v485
        %v487 = vand.u32 %v328, 4294901760
        %488 = vmatmul.f32.gmra.mxu0 %v487
        %v489 = vpop.f32.mrf.mxu0
        %v490 = vadd.f32 %v395, %v489
        %v491 = vand.u32 %v331, 4294901760
        %492 = vmatmul.f32.gmra.mxu0 %v491
        %v493 = vpop.f32.mrf.mxu0
        %v494 = vadd.f32 %v403, %v493
        %v495 = vand.u32 %v334, 4294901760
        %496 = vmatmul.f32.gmra.mxu0 %v495
        %v497 = vpop.f32.mrf.mxu0
        %v498 = vadd.f32 %v411, %v497
        %v499 = vand.u32 %v337, 4294901760
        %500 = vmatmul.f32.gmra.mxu0 %v499
        %v501 = vpop.f32.mrf.mxu0
        %v502 = vadd.f32 %v419, %v501
        %v503 = vand.u32 %v340, 4294901760
        %504 = vmatmul.f32.gmra.mxu0 %v503
        %v505 = vpop.f32.mrf.mxu0
        %v506 = vadd.f32 %v427, %v505
        %507 = vdwg.mxu0
        %508 = vmatpush.msra.mxu0 0.0
        %509 = vmatpush.msra.mxu0 0.0
        %510 = vmatpush.msra.mxu0 0.0
        %511 = vmatpush.msra.mxu0 0.0
        %512 = vmatpush.msra.mxu0 0.0
        %513 = vmatpush.msra.mxu0 0.0
        %514 = vmatpush.msra.mxu0 0.0
        %515 = vmatpush.msra.mxu0 0.0
        %516 = vmatpush.msra.mxu0 0.0
        %517 = vmatpush.msra.mxu0 0.0
        %v518 = vand.u32 %v306, 4294901760
        %v519 = vsub.f32 %v306, %v518
        %520 = vmatpush.msra.mxu0 %v519
        %v521 = vand.u32 %v305, 4294901760
        %v522 = vsub.f32 %v305, %v521
        %523 = vmatpush.msra.mxu0 %v522
        %v524 = vand.u32 %v293, 4294901760
        %v525 = vsub.f32 %v293, %v524
        %526 = vmatpush.msra.mxu0 %v525
        %v527 = vand.u32 %v292, 4294901760
        %v528 = vsub.f32 %v292, %v527
        %529 = vmatpush.msra.mxu0 %v528
        %v530 = vand.u32 %v276, 4294901760
        %v531 = vsub.f32 %v276, %v530
        %532 = vmatpush.msra.mxu0 %v531
        %v533 = vand.u32 %v275, 4294901760
        %v534 = vsub.f32 %v275, %v533
        %535 = vmatpush.msra.mxu0 %v534
        %v536 = vand.u32 %v319, 4294901760
        %v537 = vsub.f32 %v319, %v536
        %538 = vmatmul.f32.gmra.mxu0 %v537
        %v539 = vpop.f32.mrf.mxu0
        %v540 = vadd.f32 %v478, %v539
        %v541 = vand.u32 %v322, 4294901760
        %v542 = vsub.f32 %v322, %v541
        %543 = vmatmul.f32.gmra.mxu0 %v542
        %v544 = vpop.f32.mrf.mxu0
        %v545 = vadd.f32 %v482, %v544
        %v546 = vand.u32 %v325, 4294901760
        %v547 = vsub.f32 %v325, %v546
        %548 = vmatmul.f32.gmra.mxu0 %v547
        %v549 = vpop.f32.mrf.mxu0
        %v550 = vadd.f32 %v486, %v549
        %v551 = vand.u32 %v328, 4294901760
        %v552 = vsub.f32 %v328, %v551
        %553 = vmatmul.f32.gmra.mxu0 %v552
        %v554 = vpop.f32.mrf.mxu0
        %v555 = vadd.f32 %v490, %v554
        %v556 = vand.u32 %v331, 4294901760
        %v557 = vsub.f32 %v331, %v556
        %558 = vmatmul.f32.gmra.mxu0 %v557
        %v559 = vpop.f32.mrf.mxu0
        %v560 = vadd.f32 %v494, %v559
        %v561 = vand.u32 %v334, 4294901760
        %v562 = vsub.f32 %v334, %v561
        %563 = vmatmul.f32.gmra.mxu0 %v562
        %v564 = vpop.f32.mrf.mxu0
        %v565 = vadd.f32 %v498, %v564
        %v566 = vand.u32 %v337, 4294901760
        %v567 = vsub.f32 %v337, %v566
        %568 = vmatmul.f32.gmra.mxu0 %v567
        %v569 = vpop.f32.mrf.mxu0
        %v570 = vadd.f32 %v502, %v569
        %v571 = vand.u32 %v340, 4294901760
        %v572 = vsub.f32 %v340, %v571
        %573 = vmatmul.f32.gmra.mxu0 %v572
        %v574 = vpop.f32.mrf.mxu0
        %v575 = vadd.f32 %v506, %v574
        %576 = vdwg.mxu0
        %577 = vmatpush.msra.mxu0 0.0
        %578 = vmatpush.msra.mxu0 0.0
        %579 = vmatpush.msra.mxu0 0.0
        %580 = vmatpush.msra.mxu0 0.0
        %581 = vmatpush.msra.mxu0 0.0
        %582 = vmatpush.msra.mxu0 0.0
        %583 = vmatpush.msra.mxu0 0.0
        %584 = vmatpush.msra.mxu0 0.0
        %585 = vmatpush.msra.mxu0 0.0
        %586 = vmatpush.msra.mxu0 0.0
        %v587 = vand.u32 %v306, 4294901760
        %588 = vmatpush.msra.mxu0 %v587
        %v589 = vand.u32 %v305, 4294901760
        %590 = vmatpush.msra.mxu0 %v589
        %v591 = vand.u32 %v293, 4294901760
        %592 = vmatpush.msra.mxu0 %v591
        %v593 = vand.u32 %v292, 4294901760
        %594 = vmatpush.msra.mxu0 %v593
        %v595 = vand.u32 %v276, 4294901760
        %596 = vmatpush.msra.mxu0 %v595
        %v597 = vand.u32 %v275, 4294901760
        %598 = vmatpush.msra.mxu0 %v597
        %v599 = vand.u32 %v319, 4294901760
        %v600 = vsub.f32 %v319, %v599
        %v601 = vand.u32 %v600, 4294901760
        %602 = vmatmul.f32.gmra.mxu0 %v601
        %v603 = vpop.f32.mrf.mxu0
        %v604 = vadd.f32 %v540, %v603
        %v605 = vand.u32 %v322, 4294901760
        %v606 = vsub.f32 %v322, %v605
        %v607 = vand.u32 %v606, 4294901760
        %608 = vmatmul.f32.gmra.mxu0 %v607
        %v609 = vpop.f32.mrf.mxu0
        %v610 = vadd.f32 %v545, %v609
        %v611 = vand.u32 %v325, 4294901760
        %v612 = vsub.f32 %v325, %v611
        %v613 = vand.u32 %v612, 4294901760
        %614 = vmatmul.f32.gmra.mxu0 %v613
        %v615 = vpop.f32.mrf.mxu0
        %v616 = vadd.f32 %v550, %v615
        %v617 = vand.u32 %v328, 4294901760
        %v618 = vsub.f32 %v328, %v617
        %v619 = vand.u32 %v618, 4294901760
        %620 = vmatmul.f32.gmra.mxu0 %v619
        %v621 = vpop.f32.mrf.mxu0
        %v622 = vadd.f32 %v555, %v621
        %v623 = vand.u32 %v331, 4294901760
        %v624 = vsub.f32 %v331, %v623
        %v625 = vand.u32 %v624, 4294901760
        %626 = vmatmul.f32.gmra.mxu0 %v625
        %v627 = vpop.f32.mrf.mxu0
        %v628 = vadd.f32 %v560, %v627
        %v629 = vand.u32 %v334, 4294901760
        %v630 = vsub.f32 %v334, %v629
        %v631 = vand.u32 %v630, 4294901760
        %632 = vmatmul.f32.gmra.mxu0 %v631
        %v633 = vpop.f32.mrf.mxu0
        %v634 = vadd.f32 %v565, %v633
        %v635 = vand.u32 %v337, 4294901760
        %v636 = vsub.f32 %v337, %v635
        %v637 = vand.u32 %v636, 4294901760
        %638 = vmatmul.f32.gmra.mxu0 %v637
        %v639 = vpop.f32.mrf.mxu0
        %v640 = vadd.f32 %v570, %v639
        %v641 = vand.u32 %v340, 4294901760
        %v642 = vsub.f32 %v340, %v641
        %v643 = vand.u32 %v642, 4294901760
        %644 = vmatmul.f32.gmra.mxu0 %v643
        %v645 = vpop.f32.mrf.mxu0
        %v646 = vadd.f32 %v575, %v645
        %647 = vdwg.mxu0
        %648 = vmatpush.msra.mxu0 0.0
        %649 = vmatpush.msra.mxu0 0.0
        %650 = vmatpush.msra.mxu0 0.0
        %651 = vmatpush.msra.mxu0 0.0
        %652 = vmatpush.msra.mxu0 0.0
        %653 = vmatpush.msra.mxu0 0.0
        %654 = vmatpush.msra.mxu0 0.0
        %655 = vmatpush.msra.mxu0 0.0
        %656 = vmatpush.msra.mxu0 0.0
        %657 = vmatpush.msra.mxu0 0.0
        %v658 = vand.u32 %v306, 4294901760
        %v659 = vsub.f32 %v306, %v658
        %v660 = vand.u32 %v659, 4294901760
        %661 = vmatpush.msra.mxu0 %v660
        %v662 = vand.u32 %v305, 4294901760
        %v663 = vsub.f32 %v305, %v662
        %v664 = vand.u32 %v663, 4294901760
        %665 = vmatpush.msra.mxu0 %v664
        %v666 = vand.u32 %v293, 4294901760
        %v667 = vsub.f32 %v293, %v666
        %v668 = vand.u32 %v667, 4294901760
        %669 = vmatpush.msra.mxu0 %v668
        %v670 = vand.u32 %v292, 4294901760
        %v671 = vsub.f32 %v292, %v670
        %v672 = vand.u32 %v671, 4294901760
        %673 = vmatpush.msra.mxu0 %v672
        %v674 = vand.u32 %v276, 4294901760
        %v675 = vsub.f32 %v276, %v674
        %v676 = vand.u32 %v675, 4294901760
        %677 = vmatpush.msra.mxu0 %v676
        %v678 = vand.u32 %v275, 4294901760
        %v679 = vsub.f32 %v275, %v678
        %v680 = vand.u32 %v679, 4294901760
        %681 = vmatpush.msra.mxu0 %v680
        %v682 = vand.u32 %v319, 4294901760
        %683 = vmatmul.f32.gmra.mxu0 %v682
        %v684 = vpop.f32.mrf.mxu0
        %v685 = vadd.f32 %v604, %v684
        %v686 = vand.u32 %v322, 4294901760
        %687 = vmatmul.f32.gmra.mxu0 %v686
        %v688 = vpop.f32.mrf.mxu0
        %v689 = vadd.f32 %v610, %v688
        %v690 = vand.u32 %v325, 4294901760
        %691 = vmatmul.f32.gmra.mxu0 %v690
        %v692 = vpop.f32.mrf.mxu0
        %v693 = vadd.f32 %v616, %v692
        %v694 = vand.u32 %v328, 4294901760
        %695 = vmatmul.f32.gmra.mxu0 %v694
        %v696 = vpop.f32.mrf.mxu0
        %v697 = vadd.f32 %v622, %v696
        %v698 = vand.u32 %v331, 4294901760
        %699 = vmatmul.f32.gmra.mxu0 %v698
        %v700 = vpop.f32.mrf.mxu0
        %v701 = vadd.f32 %v628, %v700
        %v702 = vand.u32 %v334, 4294901760
        %703 = vmatmul.f32.gmra.mxu0 %v702
        %v704 = vpop.f32.mrf.mxu0
        %v705 = vadd.f32 %v634, %v704
        %v706 = vand.u32 %v337, 4294901760
        %707 = vmatmul.f32.gmra.mxu0 %v706
        %v708 = vpop.f32.mrf.mxu0
        %v709 = vadd.f32 %v640, %v708
        %v710 = vand.u32 %v340, 4294901760
        %711 = vmatmul.f32.gmra.mxu0 %v710
        %v712 = vpop.f32.mrf.mxu0
        %v713 = vadd.f32 %v646, %v712
        %714 = vdwg.mxu0
        %715 = vmatpush.msra.mxu0 0.0
        %716 = vmatpush.msra.mxu0 0.0
        %717 = vmatpush.msra.mxu0 0.0
        %718 = vmatpush.msra.mxu0 0.0
        %719 = vmatpush.msra.mxu0 0.0
        %720 = vmatpush.msra.mxu0 0.0
        %721 = vmatpush.msra.mxu0 0.0
        %722 = vmatpush.msra.mxu0 0.0
        %723 = vmatpush.msra.mxu0 0.0
        %724 = vmatpush.msra.mxu0 0.0
        %v725 = vand.u32 %v306, 4294901760
        %726 = vmatpush.msra.mxu0 %v725
        %v727 = vand.u32 %v305, 4294901760
        %728 = vmatpush.msra.mxu0 %v727
        %v729 = vand.u32 %v293, 4294901760
        %730 = vmatpush.msra.mxu0 %v729
        %v731 = vand.u32 %v292, 4294901760
        %732 = vmatpush.msra.mxu0 %v731
        %v733 = vand.u32 %v276, 4294901760
        %734 = vmatpush.msra.mxu0 %v733
        %v735 = vand.u32 %v275, 4294901760
        %736 = vmatpush.msra.mxu0 %v735
        %v737 = vand.u32 %v319, 4294901760
        %738 = vmatmul.f32.gmra.mxu0 %v737
        %v739 = vpop.f32.mrf.mxu0
        %v740 = vadd.f32 %v685, %v739
        %v741 = vand.u32 %v322, 4294901760
        %742 = vmatmul.f32.gmra.mxu0 %v741
        %v743 = vpop.f32.mrf.mxu0
        %v744 = vadd.f32 %v689, %v743
        %v745 = vand.u32 %v325, 4294901760
        %746 = vmatmul.f32.gmra.mxu0 %v745
        %v747 = vpop.f32.mrf.mxu0
        %v748 = vadd.f32 %v693, %v747
        %v749 = vand.u32 %v328, 4294901760
        %750 = vmatmul.f32.gmra.mxu0 %v749
        %v751 = vpop.f32.mrf.mxu0
        %v752 = vadd.f32 %v697, %v751
        %v753 = vand.u32 %v331, 4294901760
        %754 = vmatmul.f32.gmra.mxu0 %v753
        %v755 = vpop.f32.mrf.mxu0
        %v756 = vadd.f32 %v701, %v755
        %v757 = vand.u32 %v334, 4294901760
        %758 = vmatmul.f32.gmra.mxu0 %v757
        %v759 = vpop.f32.mrf.mxu0
        %v760 = vadd.f32 %v705, %v759
        %v761 = vand.u32 %v337, 4294901760
        %762 = vmatmul.f32.gmra.mxu0 %v761
        %v763 = vpop.f32.mrf.mxu0
        %v764 = vadd.f32 %v709, %v763
        %v765 = vand.u32 %v340, 4294901760
        %766 = vmatmul.f32.gmra.mxu0 %v765
        %v767 = vpop.f32.mrf.mxu0
        %v768 = vadd.f32 %v713, %v767
        %769 = vdwg.mxu0
        %v770 = vmul.f32 %v740, %v740
        %v771 = vmul.f32 %v744, %v744
        %v772 = vmul.f32 %v748, %v748
        %v773 = vmul.f32 %v752, %v752
        %v774 = vadd.f32 %v770, %v772
        %v775 = vadd.f32 %v771, %v773
        %v776 = vmul.f32 %v756, %v756
        %v777 = vmul.f32 %v760, %v760
        %v778 = vmul.f32 %v764, %v764
        %v779 = vmul.f32 %v768, %v768
        %v780 = vadd.f32 %v776, %v778
        %v781 = vadd.f32 %v777, %v779
        %v782 = vmax.f32 %v774, %v780
        %v783 = vmax.f32 %v775, %v781
        %v784 = vadd.f32 %v782, 1e-09
        %v785 = vadd.f32 %v783, 1e-09
        %v786 = vlog2.pop %v784
        %v787 = vmul.f32 %v786, 0.6931472
        %v788 = vlog2.pop %v785
        %v789 = vmul.f32 %v788, 0.6931472
        %v790 = vadd.f32 %v787, 20.723267
        %v791 = vadd.f32 %v789, 20.723267
        %v792 = vmul.f32 %v790, 0.04825494
        %v793 = vmul.f32 %v791, 0.04825494
        %794 = vst [vmem:[%s273] sm:$0xff] %v792
        %795 = vst [vmem:[%s273 + $0x8] sm:$0xff] %v793
        %s796 = sand.u32 %s121, 1
        %s797 = scalar_lea.sflag [#allocation5], %s796
        %s798 = sand.u32 %s121, 1
        %s799 = smul.addr %s798, 16
        %s800 = scalar_lea.vmem [#allocation6], %s799
        // Predicated region
        $region75: #{tpu_custom_call.1} parent=65 // pred_check
          %p801 = pneg %p131
        $region76: #{tpu_custom_call.1} parent=65 // pred_check_branch
          %803 = sbr.rel (%p801) target = $region78
        $region77: #{tpu_custom_call.1} parent=65 // pred_region
          %805 = vsyncadd %s797, 0
          %s806 = smul.addr %s24, 2
          %s807 = sadd.s32 %s25, %s806
          %s808 = smul.addr %s807, 8
          %s809 = scalar_lea.hbm %s3, %s808
          %s810 = sshll.u32 %s800, 4
          %s811 = int_to_ptr.vmem [resolvable:$true] %s810
          %s812 = sshll.u32 %s809, 4
          %s813 = int_to_ptr.hbm [resolvable:$true] %s812
          %818 = dma.vmem_to_hbm [thread:$0]  %s811, 256, %s813, %s797, 128, 128, 8
        $region78: #{tpu_custom_call.1} parent=65 // pred_fallthru
          _
      $region66: #{tpu_custom_call.1} parent=5 // pred_fallthru
        _
      %p819 = scmp.le.s32.totalorder 2, %s15
      // Predicated region
      $region79: #{tpu_custom_call.1} parent=5 // pred_check
        %p820 = pneg %p819
      $region80: #{tpu_custom_call.1} parent=5 // pred_check_branch
        %822 = sbr.rel (%p820) target = $region82
      $region81: #{tpu_custom_call.1} parent=5 // pred_region
        %s823 = ssub.s32 %s15, 2
        // Predicated region
        $region83: #{tpu_custom_call.1} parent=81 // pred_check
          %p824 = pneg %p137
        $region84: #{tpu_custom_call.1} parent=81 // pred_check_branch
          %826 = sbr.rel (%p824) target = $region86
        $region85: #{tpu_custom_call.1} parent=81 // pred_region
          %s827 = sand.u32 %s122, 1
          %s828 = scalar_lea.sflag [#allocation5], %s827
          %s829 = sand.u32 %s122, 1
          %s830 = smul.addr %s829, 16
          %s831 = scalar_lea.vmem [#allocation6], %s830
          %833 = dma.done %s828, 256
        $region86: #{tpu_custom_call.1} parent=81 // pred_fallthru
          _
      $region82: #{tpu_custom_call.1} parent=5 // pred_fallthru
        _
    $region6: #{tpu_custom_call.1} parent=1 // loop_footer
      %s19 = sadd.s32 1, %s15
    $region7: #{tpu_custom_call.1} parent=1 // loop_footer_branch
      %14 = sbr.rel target = $region3
    $region8: #{tpu_custom_call.1} parent=1 // loop_exit
      _
    %834 = vsyncpa [#allocation4], 1
    %s835 = scalar_lea.sflag [#allocation4], 1
    %836 = vsyncpa %s835, 1
    %837 = vsyncpa [#allocation5], 1
    %s838 = scalar_lea.sflag [#allocation5], 1
    %839 = vsyncpa %s838, 1

</llo_original>
